<compile_context>
chip_gen: v7x
topology: tpu7x:2x2x1
jax: 0.10.0
libtpu: 0.0.40
codegen_flags: <defaults>
</compile_context>

<pallas_src>
import functools
import math
from functools import partial
from typing import NamedTuple

import jax
import jax.numpy as jnp
from jax.experimental import pallas as pl
from jax.experimental.pallas import tpu as pltpu


# --------------------------------------------------------------------------- #
# Small helpers
# --------------------------------------------------------------------------- #
def _round_up(n, m):
    return ((n + m - 1) // m) * m


def _cdiv(a, b):
    return -(-a // b)


@functools.lru_cache(maxsize=None)
def _tpu_hw_info():
    """Returns (lane_align, vmem_capacity_bytes) for the attached TPU."""
    kind = ""
    try:
        kind = jax.devices()[0].device_kind.lower()
    except Exception:
        pass
    vmem_cap = None
    try:
        vmem_cap = int(pltpu.get_tpu_info().vmem_capacity_bytes)
    except Exception:
        vmem_cap = None
    if not vmem_cap or vmem_cap <= 0:
        vmem_cap = (64 << 20) if "v7" in kind else (128 << 20)
    # v6e/v7x MXUs are 256x256 -> pad K/N dims to 256; older gens (128x128): 128.
    lane_align = 256 if ("v6" in kind or "v7" in kind) else 128
    return lane_align, vmem_cap


@functools.lru_cache(maxsize=None)
def _single_buffer_supported():
    """One-time probe: does pipeline_mode=pl.Buffered(1) lower on this install?

    This is the only place a broad except is allowed; the real kernel's
    compile/VMEM errors always surface to the caller.
    """
    try:
        def _probe(x_ref, o_ref):
            o_ref[...] = x_ref[...] * 2.0

        out = pl.pallas_call(
            _probe,
            out_shape=jax.ShapeDtypeStruct((8, 128), jnp.float32),
            grid=(1,),
            in_specs=[pl.BlockSpec((8, 128), lambda i: (0, 0),
                                   pipeline_mode=pl.Buffered(1))],
            out_specs=pl.BlockSpec((8, 128), lambda i: (0, 0)),
        )(jnp.ones((8, 128), jnp.float32))
        jax.block_until_ready(out)
        return True
    except Exception:
        return False


# --------------------------------------------------------------------------- #
# Kernels
# --------------------------------------------------------------------------- #
def _mlp_kernel(x_ref, w0_ref, b0_ref, w1_ref, b1_ref, w2_ref, b2_ref, o_ref):
    """Fully resident-weight path. grid = (batch_tiles,)."""
    x = x_ref[...]                                                   # bf16

    # fc0 (+ folded BN0) -> relu; bias add / relu in bf16 (dropout = identity)
    h0 = jnp.dot(x, w0_ref[...],
                 preferred_element_type=jnp.float32).astype(jnp.bfloat16)
    h0 = jnp.maximum(h0 + b0_ref[...], 0)

    # fc1 (+ folded BN1) -> relu
    h1 = jnp.dot(h0, w1_ref[...],
                 preferred_element_type=jnp.float32).astype(jnp.bfloat16)
    h1 = jnp.maximum(h1 + b1_ref[...], 0)

    # fc2 -> log_softmax (f32 epilogue; padded classes carry a -1e30 f32 bias)
    logits = jnp.dot(h1, w2_ref[...],
                     preferred_element_type=jnp.float32) + b2_ref[...]
    z = logits - jnp.max(logits, axis=-1, keepdims=True)
    lse = jnp.log(jnp.sum(jnp.exp(z), axis=-1, keepdims=True))
    o_ref[...] = (z - lse).astype(o_ref.dtype)


def _mlp_kernel_ktiled(x_ref, w0_ref, b0_ref, w1_ref, b1_ref, w2_ref, b2_ref,
                       o_ref, acc_ref):
    """fc0 K-tiled path for large image_size. grid = (batch_tiles, k_tiles)."""
    k = pl.program_id(1)

    @pl.when(k == 0)
    def _():
        acc_ref[...] = jnp.zeros_like(acc_ref)

    acc_ref[...] += jnp.dot(x_ref[...], w0_ref[...],
                            preferred_element_type=jnp.float32)

    @pl.when(k == pl.num_programs(1) - 1)
    def _():
        h0 = jnp.maximum(acc_ref[...].astype(jnp.bfloat16) + b0_ref[...], 0)
        h1 = jnp.dot(h0, w1_ref[...],
                     preferred_element_type=jnp.float32).astype(jnp.bfloat16)
        h1 = jnp.maximum(h1 + b1_ref[...], 0)
        logits = jnp.dot(h1, w2_ref[...],
                         preferred_element_type=jnp.float32) + b2_ref[...]
        z = logits - jnp.max(logits, axis=-1, keepdims=True)
        lse = jnp.log(jnp.sum(jnp.exp(z), axis=-1, keepdims=True))
        o_ref[...] = (z - lse).astype(o_ref.dtype)


# --------------------------------------------------------------------------- #
# Static plan + jitted forward
# --------------------------------------------------------------------------- #
class _Config(NamedTuple):
    tile_b: int
    tk: int
    Fp: int
    H1p: int
    H2p: int
    Cp: int
    k_tiled: bool
    single_buffer: bool
    vmem_limit: int        # 0 -> use default scoped limit


def _idx_const1(i):
    return (0, 0)


def _idx_const2(i, k):
    return (0, 0)


@partial(jax.jit, static_argnames=("cfg",))
def _forward_impl(x, params, cfg):
    (w0, b0, s0, t0, w1, b1, s1, t1, w2, b2) = params
    F_in = w0.shape[0]
    C = w2.shape[1]

    x2d = x.reshape(-1, F_in).astype(jnp.float32)        # x.view(-1, image_size)
    B = x2d.shape[0]
    Bp = _round_up(B, cfg.tile_b)

    # ---- fold eval-mode BatchNorm1d (scale/shift) into fc0 / fc1 ----
    w0f = w0 * s0[None, :]
    b0f = b0 * s0 + t0
    w1f = w1 * s1[None, :]
    b1f = b1 * s1 + t1

    def pad2(a, rows, cols):
        return jnp.pad(a, ((0, rows - a.shape[0]), (0, cols - a.shape[1])))

    def pad_row(v, n, fill=0.0, dtype=jnp.float32):
        return jnp.pad(v, (0, n - v.shape[0]),
                       constant_values=fill).reshape(1, n).astype(dtype)

    w0p = pad2(w0f, cfg.Fp, cfg.H1p).astype(jnp.bfloat16)
    w1p = pad2(w1f, cfg.H1p, cfg.H2p).astype(jnp.bfloat16)
    w2p = pad2(w2, cfg.H2p, cfg.Cp).astype(jnp.bfloat16)
    b0p = pad_row(b0f, cfg.H1p, dtype=jnp.bfloat16)
    b1p = pad_row(b1f, cfg.H2p, dtype=jnp.bfloat16)
    b2p = pad_row(b2, cfg.Cp, fill=-1e30, dtype=jnp.float32)  # f32 only!
    xp = pad2(x2d, Bp, cfg.Fp).astype(jnp.bfloat16)

    cost = pl.CostEstimate(
        flops=int(2 * Bp * (cfg.Fp * cfg.H1p + cfg.H1p * cfg.H2p
                            + cfg.H2p * cfg.Cp)),
        transcendentals=int(Bp * cfg.Cp),
        bytes_accessed=int(xp.size * 2
                           + (w0p.size + w1p.size + w2p.size) * 2
                           + (b0p.size + b1p.size) * 2 + b2p.size * 4
                           + Bp * cfg.Cp * 2),
    )

    def const_spec(shape, idx_map):
        if cfg.single_buffer:
            # constant block index -> never re-fetched; 1 buffer halves residency
            return pl.BlockSpec(shape, idx_map, pipeline_mode=pl.Buffered(1))
        return pl.BlockSpec(shape, idx_map)

    if cfg.k_tiled:
        grid = (Bp // cfg.tile_b, cfg.Fp // cfg.tk)
        in_specs = [
            pl.BlockSpec((cfg.tile_b, cfg.tk), lambda i, k: (i, k)),   # x tile
            pl.BlockSpec((cfg.tk, cfg.H1p), lambda i, k: (k, 0)),      # w0 K-slice
            const_spec((1, cfg.H1p), _idx_const2),
            const_spec((cfg.H1p, cfg.H2p), _idx_const2),
            const_spec((1, cfg.H2p), _idx_const2),
            const_spec((cfg.H2p, cfg.Cp), _idx_const2),
            const_spec((1, cfg.Cp), _idx_const2),
        ]
        out_specs = pl.BlockSpec((cfg.tile_b, cfg.Cp), lambda i, k: (i, 0))
        scratch = [pltpu.VMEM((cfg.tile_b, cfg.H1p), jnp.float32)]
        dims = ("parallel", "arbitrary")
        kernel = _mlp_kernel_ktiled
    else:
        grid = (Bp // cfg.tile_b,)
        in_specs = [
            pl.BlockSpec((cfg.tile_b, cfg.Fp), lambda i: (i, 0)),      # x tile
            const_spec((cfg.Fp, cfg.H1p), _idx_const1),
            const_spec((1, cfg.H1p), _idx_const1),
            const_spec((cfg.H1p, cfg.H2p), _idx_const1),
            const_spec((1, cfg.H2p), _idx_const1),
            const_spec((cfg.H2p, cfg.Cp), _idx_const1),
            const_spec((1, cfg.Cp), _idx_const1),
        ]
        out_specs = pl.BlockSpec((cfg.tile_b, cfg.Cp), lambda i: (i, 0))
        scratch = []
        dims = ("parallel",)
        kernel = _mlp_kernel

    out_pad = pl.pallas_call(
        kernel,
        out_shape=jax.ShapeDtypeStruct((Bp, cfg.Cp), jnp.bfloat16),
        grid=grid,
        in_specs=in_specs,
        out_specs=out_specs,
        scratch_shapes=scratch,
        compiler_params=pltpu.CompilerParams(
            dimension_semantics=dims,
            vmem_limit_bytes=(cfg.vmem_limit if cfg.vmem_limit else None),
        ),
        cost_estimate=cost,
    )(xp, w0p, b0p, w1p, b1p, w2p, b2p)

    return out_pad[:B, :C].astype(jnp.float32)


# --------------------------------------------------------------------------- #
# Public wrapper (static planning in Python, compute under jit)
# --------------------------------------------------------------------------- #
def model_s_forward(x, params, *, tile_b=None, force_k_tiling=False):
    """x: any shape flattening to (B, image_size). Returns (B, n_outputs) f32."""
    w0, w1, w2 = params[0], params[4], params[8]
    F_in, H1 = w0.shape
    H2, C = w1.shape[1], w2.shape[1]
    B = math.prod(x.shape) // F_in

    lane_align, vmem_cap = _tpu_hw_info()
    single_buffer = _single_buffer_supported()

    Fp = _round_up(F_in, lane_align)
    H1p = _round_up(H1, lane_align)
    H2p = _round_up(H2, lane_align)
    Cp = _round_up(C, lane_align)

    # ---- fc0 K-tiling when the fc0 weight would eat too much VMEM ----
    w0_bytes = Fp * H1p * 2
    k_tiled = bool(force_k_tiling or (w0_bytes > vmem_cap // 4))
    if k_tiled:
        target = max(vmem_cap // 8, 1 << 20)
        nk = max(2 if force_k_tiling else 1, _cdiv(w0_bytes, target))
        tk = max(128, _round_up(_cdiv(Fp, nk), 128))
        Fp = _round_up(Fp, tk)            # pad K so tk divides it (zeros are inert)
    else:
        tk = Fp

    # ---- batch tile: big (512) by default, >=2 tiles for v7x megacore ----
    auto_tile = tile_b is None
    if auto_tile:
        tile_b = 512 if B >= 512 else _round_up(max(B, 8), 8)
    tile_b = max(8, _round_up(int(tile_b), 8))
    if auto_tile and B > 8 and _cdiv(B, tile_b) < 2:
        tile_b = _round_up(_cdiv(B, 2), 8)

    # ---- VMEM residency estimate (shrink tile_b if needed) ----
    wgt_bufs = 1 if single_buffer else 2

    def vmem_need(tb):
        xin = 2 * tb * tk * 2                                 # x tile (2 bufs, bf16)
        xout = 2 * tb * Cp * 2                                # out tile (2 bufs, bf16)
        if k_tiled:
            w0buf = 2 * tk * H1p * 2                          # w0 K-slice, 2 bufs
            acc = tb * H1p * 4                                # f32 accumulator
        else:
            w0buf = wgt_bufs * Fp * H1p * 2
            acc = 0
        wrest = wgt_bufs * (H1p * H2p + H2p * Cp) * 2
        bias = wgt_bufs * (8 * (H1p + H2p) * 2 + 8 * Cp * 4)  # sublane-padded
        return xin + xout + w0buf + wrest + bias + acc + (1 << 20)

    budget = max(vmem_cap - (4 << 20), 8 << 20)
    while tile_b > 8 and vmem_need(tile_b) > budget:
        tile_b = max(8, _round_up(tile_b // 2, 8))

    need = vmem_need(tile_b)
    # v5e's default scoped VMEM limit is 16 MiB; raise explicitly past that.
    vmem_limit = 0
    if need > (16 << 20):
        vmem_limit = int(min(max(need * 12 // 10, need + (2 << 20)), budget))

    cfg = _Config(tile_b=tile_b, tk=tk, Fp=Fp, H1p=H1p, H2p=H2p, Cp=Cp,
                  k_tiled=k_tiled, single_buffer=single_buffer,
                  vmem_limit=vmem_limit)
    return _forward_impl(x, params, cfg=cfg)


# --------------------------------------------------------------------------- #
# Parameter init (matches ModelS.__init__ shapes; BN eval-mode stats) + reference
# --------------------------------------------------------------------------- #
def init_params(key, image_size, n_outputs):
    layer1 = int(0.5 * image_size)
    layer2 = int(0.5 * layer1)
    ks = jax.random.split(key, 6)

    def linear(kw, kb, fan_in, fan_out):
        bound = 1.0 / jnp.sqrt(fan_in)
        # stored transposed: (in, out) so the kernel computes x @ W
        w = jax.random.uniform(kw, (fan_in, fan_out), jnp.float32, -bound, bound)
        b = jax.random.uniform(kb, (fan_out,), jnp.float32, -bound, bound)
        return w, b

    w0, b0 = linear(ks[0], ks[1], image_size, layer1)
    w1, b1 = linear(ks[2], ks[3], layer1, layer2)
    w2, b2 = linear(ks[4], ks[5], layer2, n_outputs)

    eps = 1e-5

    def bn_fold(n):
        gamma = jnp.ones((n,), jnp.float32)
        beta = jnp.zeros((n,), jnp.float32)
        running_mean = jnp.zeros((n,), jnp.float32)
        running_var = jnp.ones((n,), jnp.float32)
        scale = gamma / jnp.sqrt(running_var + eps)
        shift = beta - running_mean * scale
        return scale, shift

    s0, t0 = bn_fold(layer1)
    s1, t1 = bn_fold(layer2)
    return (w0, b0, s0, t0, w1, b1, s1, t1, w2, b2)


def reference_forward(x, params):
    """Pure-JAX f32 reference of the eval-mode forward pass."""
    (w0, b0, s0, t0, w1, b1, s1, t1, w2, b2) = params
    h = x.reshape(-1, w0.shape[0]).astype(jnp.float32)
    h = jnp.maximum((h @ w0 + b0) * s0 + t0, 0.0)
    h = jnp.maximum((h @ w1 + b1) * s1 + t1, 0.0)
    logits = h @ w2 + b2
    return jax.nn.log_softmax(logits, axis=-1)


if __name__ == "__main__":
    # small shapes consistent with the module: flattenable image input
    batch, C_in, H, W = 20, 1, 8, 8            # image_size = 64
    image_size = C_in * H * W
    n_outputs = 10

    key = jax.random.PRNGKey(0)
    kx, kp = jax.random.split(key)
    x = jax.random.normal(kx, (batch, C_in, H, W), jnp.float32)   # NCHW-like input
    params = init_params(kp, image_size, n_outputs)

    ref = reference_forward(x, params)

    # 1) default fused path: resident weights, auto batch tile (>=2 grid steps)
    out = jax.block_until_ready(model_s_forward(x, params))
    assert out.shape == (batch, n_outputs)
    row_sums = jnp.sum(jnp.exp(out), axis=1)                 # bf16 output store
    assert bool(jnp.all(jnp.abs(row_sums - 1.0) < 3e-2))
    assert bool(jnp.max(jnp.abs(out - ref)) < 1e-1)          # bf16 matmul/output tol

    # 2) K-tiled fc0 path (auto-selected for large image_size; forced here to
    #    exercise the accumulator / pl.when init-finalize codepath)
    out_kt = jax.block_until_ready(model_s_forward(x, params, force_k_tiling=True))
    assert out_kt.shape == (batch, n_outputs)
    assert bool(jnp.max(jnp.abs(out_kt - ref)) < 1e-1)

    print("KERNEL_OK")
</pallas_src>

<mosaic_0001>
module attributes {stable_mosaic.version = 11 : i64} {
  func.func @_probe(%arg0: i32, %arg1: memref<8x128xf32, #tpu.memory_space<vmem>>, %arg2: memref<8x128xf32, #tpu.memory_space<vmem>>) attributes {dimension_semantics = [#tpu.dimension_semantics<arbitrary>], iteration_bounds = array<i64: 1>, scalar_prefetch = 0 : i64, scratch_operands = 0 : i64, tpu.core_type = #tpu.core_type<tc>, window_params = [{pipeline_mode = #tpu.pipeline_mode<synchronous>, transform_indices = @transform_0, window_bounds = array<i64: 8, 128>}, {pipeline_mode = #tpu.pipeline_mode<synchronous>, transform_indices = @transform_1, window_bounds = array<i64: 8, 128>}]} {
    %c0 = arith.constant 0 : index
    %c0_0 = arith.constant 0 : index
    %0 = vector.load %arg1[%c0, %c0_0] : memref<8x128xf32, #tpu.memory_space<vmem>>, vector<8x128xf32>
    %cst = arith.constant 2.000000e+00 : f32
    %1 = vector.broadcast %cst : f32 to vector<8x128xf32>
    %2 = arith.mulf %0, %1 : vector<8x128xf32>
    %c0_1 = arith.constant 0 : index
    %c0_2 = arith.constant 0 : index
    %3 = vector.load %arg2[%c0_1, %c0_2] : memref<8x128xf32, #tpu.memory_space<vmem>>, vector<8x128xf32>
    tpu.vector_store %arg2[%c0_1, %c0_2], %2 {strides = array<i32>} : memref<8x128xf32, #tpu.memory_space<vmem>>, vector<8x128xf32>,
    return
  }
  func.func @transform_0(%arg0: i32) -> (i32, i32) {
    %c0_i32 = arith.constant 0 : i32
    %c0_i32_0 = arith.constant 0 : i32
    %c0_i32_1 = arith.constant 0 : i32
    return %c0_i32, %c0_i32_0 : i32, i32
  }
  func.func @transform_1(%arg0: i32) -> (i32, i32) {
    %c0_i32 = arith.constant 0 : i32
    %c0_i32_0 = arith.constant 0 : i32
    %c0_i32_1 = arith.constant 0 : i32
    return %c0_i32, %c0_i32_0 : i32, i32
  }
}

module attributes {stable_mosaic.version = 11 : i64} {
  func.func @_mlp_kernel(%arg0: i32, %arg1: memref<16x128xbf16, #tpu.memory_space<vmem>>, %arg2: memref<128x128xbf16, #tpu.memory_space<vmem>>, %arg3: memref<1x128xbf16, #tpu.memory_space<vmem>>, %arg4: memref<128x128xbf16, #tpu.memory_space<vmem>>, %arg5: memref<1x128xbf16, #tpu.memory_space<vmem>>, %arg6: memref<128x128xbf16, #tpu.memory_space<vmem>>, %arg7: memref<1x128xf32, #tpu.memory_space<vmem>>, %arg8: memref<16x128xbf16, #tpu.memory_space<vmem>>) attributes {dimension_semantics = [#tpu.dimension_semantics<parallel>], iteration_bounds = array<i64: 2>, scalar_prefetch = 0 : i64, scratch_operands = 0 : i64, tpu.core_type = #tpu.core_type<tc>, window_params = [{transform_indices = @transform_0, window_bounds = array<i64: 16, 128>}, {pipeline_mode = #tpu.pipeline_mode<synchronous>, transform_indices = @transform_1, window_bounds = array<i64: 128, 128>}, {pipeline_mode = #tpu.pipeline_mode<synchronous>, transform_indices = @transform_2, window_bounds = array<i64: 1, 128>}, {pipeline_mode = #tpu.pipeline_mode<synchronous>, transform_indices = @transform_3, window_bounds = array<i64: 128, 128>}, {pipeline_mode = #tpu.pipeline_mode<synchronous>, transform_indices = @transform_4, window_bounds = array<i64: 1, 128>}, {pipeline_mode = #tpu.pipeline_mode<synchronous>, transform_indices = @transform_5, window_bounds = array<i64: 128, 128>}, {pipeline_mode = #tpu.pipeline_mode<synchronous>, transform_indices = @transform_6, window_bounds = array<i64: 1, 128>}, {transform_indices = @transform_7, window_bounds = array<i64: 16, 128>}]} {
    %c0 = arith.constant 0 : index
    %c0_0 = arith.constant 0 : index
    %0 = vector.load %arg1[%c0, %c0_0] : memref<16x128xbf16, #tpu.memory_space<vmem>>, vector<16x128xbf16>
    %c0_1 = arith.constant 0 : index
    %c0_2 = arith.constant 0 : index
    %1 = vector.load %arg2[%c0_1, %c0_2] : memref<128x128xbf16, #tpu.memory_space<vmem>>, vector<128x128xbf16>
    %cst = arith.constant dense<0.000000e+00> : vector<16x128xf32>
    %2 = tpu.matmul %0, %1, %cst {dimension_numbers = #tpu.dot_dimension_numbers<[1], [0], [0], [1], [0, 0, 1, 1], [], []>} : vector<16x128xbf16>, vector<128x128xbf16>, vector<16x128xf32> -> vector<16x128xf32>
    %3 = arith.truncf %2 : vector<16x128xf32> to vector<16x128xbf16>
    %c0_3 = arith.constant 0 : index
    %c0_4 = arith.constant 0 : index
    %4 = vector.load %arg3[%c0_3, %c0_4] : memref<1x128xbf16, #tpu.memory_space<vmem>>, vector<1x128xbf16>
    %5 = vector.broadcast %4 : vector<1x128xbf16> to vector<16x128xbf16>
    %6 = arith.addf %3, %5 : vector<16x128xbf16>
    %cst_5 = arith.constant 0.000000e+00 : bf16
    %7 = vector.broadcast %cst_5 : bf16 to vector<16x128xbf16>
    %8 = arith.maximumf %6, %7 : vector<16x128xbf16>
    %c0_6 = arith.constant 0 : index
    %c0_7 = arith.constant 0 : index
    %9 = vector.load %arg4[%c0_6, %c0_7] : memref<128x128xbf16, #tpu.memory_space<vmem>>, vector<128x128xbf16>
    %cst_8 = arith.constant dense<0.000000e+00> : vector<16x128xf32>
    %10 = tpu.matmul %8, %9, %cst_8 {dimension_numbers = #tpu.dot_dimension_numbers<[1], [0], [0], [1], [0, 0, 1, 1], [], []>} : vector<16x128xbf16>, vector<128x128xbf16>, vector<16x128xf32> -> vector<16x128xf32>
    %11 = arith.truncf %10 : vector<16x128xf32> to vector<16x128xbf16>
    %c0_9 = arith.constant 0 : index
    %c0_10 = arith.constant 0 : index
    %12 = vector.load %arg5[%c0_9, %c0_10] : memref<1x128xbf16, #tpu.memory_space<vmem>>, vector<1x128xbf16>
    %13 = vector.broadcast %12 : vector<1x128xbf16> to vector<16x128xbf16>
    %14 = arith.addf %11, %13 : vector<16x128xbf16>
    %cst_11 = arith.constant 0.000000e+00 : bf16
    %15 = vector.broadcast %cst_11 : bf16 to vector<16x128xbf16>
    %16 = arith.maximumf %14, %15 : vector<16x128xbf16>
    %c0_12 = arith.constant 0 : index
    %c0_13 = arith.constant 0 : index
    %17 = vector.load %arg6[%c0_12, %c0_13] : memref<128x128xbf16, #tpu.memory_space<vmem>>, vector<128x128xbf16>
    %cst_14 = arith.constant dense<0.000000e+00> : vector<16x128xf32>
    %18 = tpu.matmul %16, %17, %cst_14 {dimension_numbers = #tpu.dot_dimension_numbers<[1], [0], [0], [1], [0, 0, 1, 1], [], []>} : vector<16x128xbf16>, vector<128x128xbf16>, vector<16x128xf32> -> vector<16x128xf32>
    %c0_15 = arith.constant 0 : index
    %c0_16 = arith.constant 0 : index
    %19 = vector.load %arg7[%c0_15, %c0_16] : memref<1x128xf32, #tpu.memory_space<vmem>>, vector<1x128xf32>
    %20 = vector.broadcast %19 : vector<1x128xf32> to vector<16x128xf32>
    %21 = arith.addf %18, %20 : vector<16x128xf32>
    %cst_17 = arith.constant dense<0xFF800000> : vector<16xf32>
    %22 = vector.multi_reduction <maximumf>, %21, %cst_17 [1] : vector<16x128xf32> to vector<16xf32>
    %23 = vector.shape_cast %22 : vector<16xf32> to vector<16x1xf32>
    %24 = vector.broadcast %23 : vector<16x1xf32> to vector<16x128xf32>
    %25 = arith.subf %21, %24 : vector<16x128xf32>
    %26 = math.exp %25 : vector<16x128xf32>
    %cst_18 = arith.constant dense<0.000000e+00> : vector<16xf32>
    %27 = vector.multi_reduction <add>, %26, %cst_18 [1] : vector<16x128xf32> to vector<16xf32>
    %28 = vector.shape_cast %27 : vector<16xf32> to vector<16x1xf32>
    %29 = math.log %28 : vector<16x1xf32>
    %30 = vector.broadcast %29 : vector<16x1xf32> to vector<16x128xf32>
    %31 = arith.subf %25, %30 : vector<16x128xf32>
    %32 = arith.truncf %31 : vector<16x128xf32> to vector<16x128xbf16>
    %c0_19 = arith.constant 0 : index
    %c0_20 = arith.constant 0 : index
    %33 = vector.load %arg8[%c0_19, %c0_20] : memref<16x128xbf16, #tpu.memory_space<vmem>>, vector<16x128xbf16>
    tpu.vector_store %arg8[%c0_19, %c0_20], %32 {strides = array<i32>} : memref<16x128xbf16, #tpu.memory_space<vmem>>, vector<16x128xbf16>,
    return
  }
  func.func @transform_0(%arg0: i32) -> (i32, i32) {
    %c0_i32 = arith.constant 0 : i32
    %c0_i32_0 = arith.constant 0 : i32
    return %arg0, %c0_i32 : i32, i32
  }
  func.func @transform_1(%arg0: i32) -> (i32, i32) {
    %c0_i32 = arith.constant 0 : i32
    %c0_i32_0 = arith.constant 0 : i32
    %c0_i32_1 = arith.constant 0 : i32
    return %c0_i32, %c0_i32_0 : i32, i32
  }
  func.func @transform_2(%arg0: i32) -> (i32, i32) {
    %c0_i32 = arith.constant 0 : i32
    %c0_i32_0 = arith.constant 0 : i32
    %c0_i32_1 = arith.constant 0 : i32
    return %c0_i32, %c0_i32_0 : i32, i32
  }
  func.func @transform_3(%arg0: i32) -> (i32, i32) {
    %c0_i32 = arith.constant 0 : i32
    %c0_i32_0 = arith.constant 0 : i32
    %c0_i32_1 = arith.constant 0 : i32
    return %c0_i32, %c0_i32_0 : i32, i32
  }
  func.func @transform_4(%arg0: i32) -> (i32, i32) {
    %c0_i32 = arith.constant 0 : i32
    %c0_i32_0 = arith.constant 0 : i32
    %c0_i32_1 = arith.constant 0 : i32
    return %c0_i32, %c0_i32_0 : i32, i32
  }
  func.func @transform_5(%arg0: i32) -> (i32, i32) {
    %c0_i32 = arith.constant 0 : i32
    %c0_i32_0 = arith.constant 0 : i32
    %c0_i32_1 = arith.constant 0 : i32
    return %c0_i32, %c0_i32_0 : i32, i32
  }
  func.func @transform_6(%arg0: i32) -> (i32, i32) {
    %c0_i32 = arith.constant 0 : i32
    %c0_i32_0 = arith.constant 0 : i32
    %c0_i32_1 = arith.constant 0 : i32
    return %c0_i32, %c0_i32_0 : i32, i32
  }
  func.func @transform_7(%arg0: i32) -> (i32, i32) {
    %c0_i32 = arith.constant 0 : i32
    %c0_i32_0 = arith.constant 0 : i32
    return %arg0, %c0_i32 : i32, i32
  }
}

</mosaic_0001>

<llo_original>
// kernel: tpu_custom_call.1
$region0: #{tpu_custom_call.1}
  #allocation0 [shape = 'u32[]', space=smem, size = 0x4, offset = 0x4, fixed_abs, tag = 'smem constant byte address 0x4 - core index']
  #allocation1 [shape = 'u32[144,128]{1,0:T(1,128)}', space=vmem, size = 0x12000, scoped, tag = 'internal scratch']
  %s0 = inlined_call_operand.hbm [shape: f32[8,128], index: 0, kind: input, shape index: {}]
  %s1 = inlined_call_operand.hbm [shape: f32[8,128], index: 1, kind: output, shape index: {}]
  %s2 = sld [smem:[#allocation0]]
  $region18: #{tpu_custom_call.1} parent=0
    _
  %s4 = ssub.s32 1, %s2
  %s5 = scalar_select 0, %s4, %s2
  $region1: #{tpu_custom_call.1} parent=0
    #allocation2 [shape = 'u8[4096]{0}', space=vmem, size = 0x1000, scoped, tag = 'input window, operand 0, single buffered']
    #allocation3 [shape = 's32[1]{0}', space=sflag, size = 0x4, scoped, tag = 'scoped memory for tpu_custom_call.1']
    #allocation4 [shape = 's32[1]{0}', space=sflag, size = 0x4, scoped, tag = 'scoped memory for tpu_custom_call.1']
    #allocation5 [shape = 'u8[4096]{0}', space=vmem, size = 0x1000, scoped, tag = 'output window, operand 0, single buffered']
    %6 = vsyncpa [#allocation3], 0
    %7 = vsyncpa [#allocation4], 0
    // Predicated region
    $region2: #{tpu_custom_call.1} parent=1 // pred_check
      _
    $region3: #{tpu_custom_call.1} parent=1 // pred_check_branch
      %9 = sbr.rel (0) target = $region5
    $region4: #{tpu_custom_call.1} parent=1 // pred_region
      %s11 = ssub.s32 128, 128
      %12 = vsyncadd [#allocation3], %s11
      %s14 = sshll.u32 [#allocation2], 4
      %s15 = int_to_ptr.vmem [resolvable:$true] %s14
      %17 = dma.hbm_to_vmem [thread:$0]  %s0, 128, %s15, [#allocation3]
    $region5: #{tpu_custom_call.1} parent=1 // pred_fallthru
      _
    // Predicated region
    $region6: #{tpu_custom_call.1} parent=1 // pred_check
      _
    $region7: #{tpu_custom_call.1} parent=1 // pred_check_branch
      %19 = sbr.rel (0) target = $region9
    $region8: #{tpu_custom_call.1} parent=1 // pred_region
      %20 = dma.done [#allocation3], 128
    $region9: #{tpu_custom_call.1} parent=1 // pred_fallthru
      _
    %v21 = vld [vmem:[#allocation2] sm:$0xff]
    %v22 = vmul.f32 %v21, 2.0
    %23 = vst [vmem:[#allocation5] sm:$0xff] %v22
    // Predicated region
    $region10: #{tpu_custom_call.1} parent=1 // pred_check
      _
    $region11: #{tpu_custom_call.1} parent=1 // pred_check_branch
      %25 = sbr.rel (0) target = $region13
    $region12: #{tpu_custom_call.1} parent=1 // pred_region
      %s27 = ssub.s32 128, 128
      %28 = vsyncadd [#allocation4], %s27
      %s30 = sshll.u32 [#allocation5], 4
      %s31 = int_to_ptr.vmem [resolvable:$true] %s30
      %33 = dma.vmem_to_hbm [thread:$0]  %s31, 128, %s1, [#allocation4]
    $region13: #{tpu_custom_call.1} parent=1 // pred_fallthru
      _
    // Predicated region
    $region14: #{tpu_custom_call.1} parent=1 // pred_check
      _
    $region15: #{tpu_custom_call.1} parent=1 // pred_check_branch
      %35 = sbr.rel (0) target = $region17
    $region16: #{tpu_custom_call.1} parent=1 // pred_region
      %36 = dma.done [#allocation4], 128
    $region17: #{tpu_custom_call.1} parent=1 // pred_fallthru
      _
    %37 = vsyncpa [#allocation3], 1
    %38 = vsyncpa [#allocation4], 1

// kernel: _forward_impl.1
$region0: #{_forward_impl.1}
  #allocation0 [shape = 'u32[]', space=smem, size = 0x4, offset = 0x4, fixed_abs, tag = 'smem constant byte address 0x4 - core index']
  #allocation1 [shape = 'u32[144,128]{1,0:T(1,128)}', space=vmem, size = 0x12000, scoped, tag = 'internal scratch']
  %s0 = inlined_call_operand.vmem [shape: bf16[32,128], index: 0, kind: input, shape index: {}]
  %s1 = inlined_call_operand.vmem [shape: bf16[128,128], index: 1, kind: input, shape index: {}]
  %s2 = inlined_call_operand.vmem [shape: bf16[1,128], index: 2, kind: input, shape index: {}]
  %s3 = inlined_call_operand.vmem [shape: bf16[128,128], index: 3, kind: input, shape index: {}]
  %s4 = inlined_call_operand.vmem [shape: bf16[1,128], index: 4, kind: input, shape index: {}]
  %s5 = inlined_call_operand.vmem [shape: bf16[128,128], index: 5, kind: input, shape index: {}]
  %s6 = inlined_call_operand.vmem [shape: f32[1,128], index: 6, kind: input, shape index: {}]
  %s7 = inlined_call_operand.vmem [shape: bf16[32,128], index: 7, kind: output, shape index: {}]
  %s8 = sld [smem:[#allocation0]]
  $region61: #{_forward_impl.1} parent=0
    _
  %s10 = ssub.s32 1, %s8
  %s11 = scalar_select 0, %s10, %s8
  loop: start=0, step=1, limit=4
  $region2: #{_forward_impl.1} parent=0 // loop_pre_header
    _
  $region3: #{_forward_impl.1} parent=0 // loop_header
    %s13 = sphi 0, %s17
    %p14 = scmp.ge.s32.totalorder %s13, 4
    %s23 = sphi 0, %s25
    %s26 = sphi 0, %s23
    %s27 = sphi 0, %s26
    %s43 = sphi 0, %s27
    %s47 = sphi 0, %s47
    %s49 = sphi 0, %s47
    %s50 = sphi 0, %s49
    %s64 = sphi 0, %s50
    %s68 = sphi 0, %s68
    %s70 = sphi 0, %s68
    %s71 = sphi 0, %s70
    %s85 = sphi 0, %s71
    %s89 = sphi 0, %s89
    %s91 = sphi 0, %s89
    %s92 = sphi 0, %s91
    %s106 = sphi 0, %s92
    %s110 = sphi 0, %s110
    %s112 = sphi 0, %s110
    %s113 = sphi 0, %s112
    %s127 = sphi 0, %s113
    %s131 = sphi 0, %s131
    %s133 = sphi 0, %s131
    %s134 = sphi 0, %s133
    %s148 = sphi 0, %s134
    %s152 = sphi 0, %s152
    %s154 = sphi 0, %s152
    %s155 = sphi 0, %s154
    %s169 = sphi 0, %s155
    %s175 = sphi 0, %s177
    %s178 = sphi 0, %s175
    %s179 = sphi 0, %s178
    %s195 = sphi 0, %s179
  $region4: #{_forward_impl.1} parent=0 // loop_header_branch
    %16 = sbr.rel (%p14) target = $region8
  $region5: #{_forward_impl.1} parent=0 // loop_body
    %s18 = ssub.s32 %s13, 1
    %s19 = ssub.s32 %s13, 2
    %s20 = sadd.s32 %s13, 1
    %s21 = ssub.s32 %s13, %s20
    %p22 = scmp.eq.s32.totalorder %s21, 0
    %s24 = sadd.s32 %s23, 1
    %s25 = scalar_select %p22, %s23, %s24
    %p28 = pneg %p22
    %p29 = scmp.eq.s32.totalorder %s13, 1
    %p30 = por %p28, %p29
    %p31 = scmp.ne.s32.totalorder %s23, %s26
    %p32 = scmp.eq.s32.totalorder %s13, 0
    %p33 = por %p31, %p32
    %p34 = scmp.ne.s32.totalorder %s23, %s26
    %p35 = scmp.eq.s32.totalorder %s18, 1
    %p36 = por %p34, %p35
    %p37 = scmp.ne.s32.totalorder %s26, %s27
    %p38 = scmp.eq.s32.totalorder %s18, 0
    %p39 = por %p37, %p38
    %p40 = scmp.ne.s32.totalorder %s26, %s27
    %p41 = scmp.eq.s32.totalorder %s19, 1
    %p42 = por %p40, %p41
    %p44 = scmp.ne.s32.totalorder %s27, %s43
    %p45 = scmp.eq.s32.totalorder %s19, 0
    %p46 = por %p44, %p45
    %s48 = sadd.s32 %s47, 1
    %p51 = scmp.eq.s32.totalorder %s13, 1
    %p52 = scmp.ne.s32.totalorder %s47, %s49
    %p53 = scmp.eq.s32.totalorder %s13, 0
    %p54 = por %p52, %p53
    %p55 = scmp.ne.s32.totalorder %s47, %s49
    %p56 = scmp.eq.s32.totalorder %s18, 1
    %p57 = por %p55, %p56
    %p58 = scmp.ne.s32.totalorder %s49, %s50
    %p59 = scmp.eq.s32.totalorder %s18, 0
    %p60 = por %p58, %p59
    %p61 = scmp.ne.s32.totalorder %s49, %s50
    %p62 = scmp.eq.s32.totalorder %s19, 1
    %p63 = por %p61, %p62
    %p65 = scmp.ne.s32.totalorder %s50, %s64
    %p66 = scmp.eq.s32.totalorder %s19, 0
    %p67 = por %p65, %p66
    %s69 = sadd.s32 %s68, 1
    %p72 = scmp.eq.s32.totalorder %s13, 1
    %p73 = scmp.ne.s32.totalorder %s68, %s70
    %p74 = scmp.eq.s32.totalorder %s13, 0
    %p75 = por %p73, %p74
    %p76 = scmp.ne.s32.totalorder %s68, %s70
    %p77 = scmp.eq.s32.totalorder %s18, 1
    %p78 = por %p76, %p77
    %p79 = scmp.ne.s32.totalorder %s70, %s71
    %p80 = scmp.eq.s32.totalorder %s18, 0
    %p81 = por %p79, %p80
    %p82 = scmp.ne.s32.totalorder %s70, %s71
    %p83 = scmp.eq.s32.totalorder %s19, 1
    %p84 = por %p82, %p83
    %p86 = scmp.ne.s32.totalorder %s71, %s85
    %p87 = scmp.eq.s32.totalorder %s19, 0
    %p88 = por %p86, %p87
    %s90 = sadd.s32 %s89, 1
    %p93 = scmp.eq.s32.totalorder %s13, 1
    %p94 = scmp.ne.s32.totalorder %s89, %s91
    %p95 = scmp.eq.s32.totalorder %s13, 0
    %p96 = por %p94, %p95
    %p97 = scmp.ne.s32.totalorder %s89, %s91
    %p98 = scmp.eq.s32.totalorder %s18, 1
    %p99 = por %p97, %p98
    %p100 = scmp.ne.s32.totalorder %s91, %s92
    %p101 = scmp.eq.s32.totalorder %s18, 0
    %p102 = por %p100, %p101
    %p103 = scmp.ne.s32.totalorder %s91, %s92
    %p104 = scmp.eq.s32.totalorder %s19, 1
    %p105 = por %p103, %p104
    %p107 = scmp.ne.s32.totalorder %s92, %s106
    %p108 = scmp.eq.s32.totalorder %s19, 0
    %p109 = por %p107, %p108
    %s111 = sadd.s32 %s110, 1
    %p114 = scmp.eq.s32.totalorder %s13, 1
    %p115 = scmp.ne.s32.totalorder %s110, %s112
    %p116 = scmp.eq.s32.totalorder %s13, 0
    %p117 = por %p115, %p116
    %p118 = scmp.ne.s32.totalorder %s110, %s112
    %p119 = scmp.eq.s32.totalorder %s18, 1
    %p120 = por %p118, %p119
    %p121 = scmp.ne.s32.totalorder %s112, %s113
    %p122 = scmp.eq.s32.totalorder %s18, 0
    %p123 = por %p121, %p122
    %p124 = scmp.ne.s32.totalorder %s112, %s113
    %p125 = scmp.eq.s32.totalorder %s19, 1
    %p126 = por %p124, %p125
    %p128 = scmp.ne.s32.totalorder %s113, %s127
    %p129 = scmp.eq.s32.totalorder %s19, 0
    %p130 = por %p128, %p129
    %s132 = sadd.s32 %s131, 1
    %p135 = scmp.eq.s32.totalorder %s13, 1
    %p136 = scmp.ne.s32.totalorder %s131, %s133
    %p137 = scmp.eq.s32.totalorder %s13, 0
    %p138 = por %p136, %p137
    %p139 = scmp.ne.s32.totalorder %s131, %s133
    %p140 = scmp.eq.s32.totalorder %s18, 1
    %p141 = por %p139, %p140
    %p142 = scmp.ne.s32.totalorder %s133, %s134
    %p143 = scmp.eq.s32.totalorder %s18, 0
    %p144 = por %p142, %p143
    %p145 = scmp.ne.s32.totalorder %s133, %s134
    %p146 = scmp.eq.s32.totalorder %s19, 1
    %p147 = por %p145, %p146
    %p149 = scmp.ne.s32.totalorder %s134, %s148
    %p150 = scmp.eq.s32.totalorder %s19, 0
    %p151 = por %p149, %p150
    %s153 = sadd.s32 %s152, 1
    %p156 = scmp.eq.s32.totalorder %s13, 1
    %p157 = scmp.ne.s32.totalorder %s152, %s154
    %p158 = scmp.eq.s32.totalorder %s13, 0
    %p159 = por %p157, %p158
    %p160 = scmp.ne.s32.totalorder %s152, %s154
    %p161 = scmp.eq.s32.totalorder %s18, 1
    %p162 = por %p160, %p161
    %p163 = scmp.ne.s32.totalorder %s154, %s155
    %p164 = scmp.eq.s32.totalorder %s18, 0
    %p165 = por %p163, %p164
    %p166 = scmp.ne.s32.totalorder %s154, %s155
    %p167 = scmp.eq.s32.totalorder %s19, 1
    %p168 = por %p166, %p167
    %p170 = scmp.ne.s32.totalorder %s155, %s169
    %p171 = scmp.eq.s32.totalorder %s19, 0
    %p172 = por %p170, %p171
    %s173 = ssub.s32 %s13, %s20
    %p174 = scmp.eq.s32.totalorder %s173, 0
    %s176 = sadd.s32 %s175, 1
    %s177 = scalar_select %p174, %s175, %s176
    %p180 = pneg %p174
    %p181 = scmp.eq.s32.totalorder %s13, 1
    %p182 = por %p180, %p181
    %p183 = scmp.ne.s32.totalorder %s175, %s178
    %p184 = scmp.eq.s32.totalorder %s13, 0
    %p185 = por %p183, %p184
    %p186 = scmp.ne.s32.totalorder %s175, %s178
    %p187 = scmp.eq.s32.totalorder %s18, 1
    %p188 = por %p186, %p187
    %p189 = scmp.ne.s32.totalorder %s178, %s179
    %p190 = scmp.eq.s32.totalorder %s18, 0
    %p191 = por %p189, %p190
    %p192 = scmp.ne.s32.totalorder %s178, %s179
    %p193 = scmp.eq.s32.totalorder %s19, 1
    %p194 = por %p192, %p193
    %p196 = scmp.ne.s32.totalorder %s179, %s195
    %p197 = scmp.eq.s32.totalorder %s19, 0
    %p198 = por %p196, %p197
    %p199 = scmp.le.s32.totalorder 1, %s13
    %p200 = scmp.lt.s32.totalorder %s13, 3
    %p201 = pnand %p199, %p200
    %p202 = pneg %p201
    // Predicated region
    $region9: #{_forward_impl.1} parent=5 // pred_check
      _
    $region10: #{_forward_impl.1} parent=5 // pred_check_branch
      %204 = sbr.rel (%p201) target = $region12
    $region11: #{_forward_impl.1} parent=5 // pred_region
      %s205 = ssub.s32 %s13, 1
      // Predicated region
      $region13: #{_forward_impl.1} parent=11 // pred_check
        %p206 = pneg %p60
      $region14: #{_forward_impl.1} parent=11 // pred_check_branch
        %208 = sbr.rel (%p206) target = $region16
      $region15: #{_forward_impl.1} parent=11 // pred_region
        _
      $region16: #{_forward_impl.1} parent=11 // pred_fallthru
        _
      // Predicated region
      $region17: #{_forward_impl.1} parent=11 // pred_check
        %p209 = pneg %p81
      $region18: #{_forward_impl.1} parent=11 // pred_check_branch
        %211 = sbr.rel (%p209) target = $region20
      $region19: #{_forward_impl.1} parent=11 // pred_region
        _
      $region20: #{_forward_impl.1} parent=11 // pred_fallthru
        _
      // Predicated region
      $region21: #{_forward_impl.1} parent=11 // pred_check
        %p212 = pneg %p102
      $region22: #{_forward_impl.1} parent=11 // pred_check_branch
        %214 = sbr.rel (%p212) target = $region24
      $region23: #{_forward_impl.1} parent=11 // pred_region
        _
      $region24: #{_forward_impl.1} parent=11 // pred_fallthru
        _
      // Predicated region
      $region25: #{_forward_impl.1} parent=11 // pred_check
        %p215 = pneg %p123
      $region26: #{_forward_impl.1} parent=11 // pred_check_branch
        %217 = sbr.rel (%p215) target = $region28
      $region27: #{_forward_impl.1} parent=11 // pred_region
        _
      $region28: #{_forward_impl.1} parent=11 // pred_fallthru
        _
      // Predicated region
      $region29: #{_forward_impl.1} parent=11 // pred_check
        %p218 = pneg %p144
      $region30: #{_forward_impl.1} parent=11 // pred_check_branch
        %220 = sbr.rel (%p218) target = $region32
      $region31: #{_forward_impl.1} parent=11 // pred_region
        _
      $region32: #{_forward_impl.1} parent=11 // pred_fallthru
        _
      // Predicated region
      $region33: #{_forward_impl.1} parent=11 // pred_check
        %p221 = pneg %p165
      $region34: #{_forward_impl.1} parent=11 // pred_check_branch
        %223 = sbr.rel (%p221) target = $region36
      $region35: #{_forward_impl.1} parent=11 // pred_region
        _
      $region36: #{_forward_impl.1} parent=11 // pred_fallthru
        _
    $region12: #{_forward_impl.1} parent=5 // pred_fallthru
      _
    %p224 = scmp.lt.s32.totalorder %s13, 2
    // Predicated region
    $region37: #{_forward_impl.1} parent=5 // pred_check
      %p225 = pneg %p224
    $region38: #{_forward_impl.1} parent=5 // pred_check_branch
      %227 = sbr.rel (%p225) target = $region40
    $region39: #{_forward_impl.1} parent=5 // pred_region
      // Predicated region
      $region41: #{_forward_impl.1} parent=39 // pred_check
        %p228 = pneg %p33
      $region42: #{_forward_impl.1} parent=39 // pred_check_branch
        %230 = sbr.rel (%p228) target = $region44
      $region43: #{_forward_impl.1} parent=39 // pred_region
        %s231 = smul.u32 2, %s13
        %p232 = scmp.lt.s32.totalorder %s231, 3
        %s233 = scalar_select %p232, %s231, 3
        %s234 = smul.addr %s233, 4
        %s235 = scalar_lea.vmem %s0, %s234
        %s236 = smul.u32 2, %s13
      $region44: #{_forward_impl.1} parent=39 // pred_fallthru
        _
    $region40: #{_forward_impl.1} parent=5 // pred_fallthru
      _
    %p237 = scmp.le.s32.totalorder 1, %s13
    %p238 = scmp.lt.s32.totalorder %s13, 3
    %p239 = pnand %p237, %p238
    %p240 = pneg %p239
    // Predicated region
    $region45: #{_forward_impl.1} parent=5 // pred_check
      _
    $region46: #{_forward_impl.1} parent=5 // pred_check_branch
      %242 = sbr.rel (%p239) target = $region48
    $region47: #{_forward_impl.1} parent=5 // pred_region
      %s243 = ssub.s32 %s13, 1
      %s244 = smul.u32 2, %s18
      %p245 = scmp.lt.s32.totalorder %s244, 3
      %s246 = scalar_select %p245, %s244, 3
      %s247 = smul.addr %s246, 4
      %s248 = scalar_lea.vmem %s0, %s247
      %p249 = pneg %p39
      %p250 = pneg %p36
      %p251 = pneg %p60
      %p252 = pneg %p57
      %p253 = pneg %p81
      %p254 = pneg %p78
      %p255 = pneg %p102
      %p256 = pneg %p99
      %p257 = pneg %p123
      %p258 = pneg %p120
      %p259 = pneg %p144
      %p260 = pneg %p141
      %p261 = pneg %p165
      %p262 = pneg %p162
      %p263 = pneg %p191
      %p264 = pneg %p188
      %s265 = smul.u32 2, %s18
      %p266 = scmp.lt.s32.totalorder %s265, 3
      %s267 = scalar_select %p266, %s265, 3
      %s268 = smul.addr %s267, 4
      %s269 = scalar_lea.vmem %s7, %s268
      %s270 = smul.u32 2, %s18
      %p271 = scmp.lt.s32.totalorder %s270, 3
      %s272 = scalar_select %p271, %s270, 3
      %s273 = smul.addr %s272, 4
      %s274 = scalar_lea.vmem %s0, %s273
      %s275 = smul.u32 2, %s18
      %s276 = smul.u32 2, %s18
      %p277 = scmp.lt.s32.totalorder %s276, 3
      %s278 = scalar_select %p277, %s276, 3
      %s279 = smul.addr %s278, 4
      %s280 = scalar_lea.vmem %s7, %s279
      %s281 = smul.u32 2, %s18
      %v283 = vld [vmem:[%s274] sm:$0xf]
      %v284 = vld [vmem:[%s274 + $0x4] sm:$0xf]
      %v285 = vld [vmem:[%s1] sm:$0xf]
      %v286 = vld [vmem:[%s1 + $0x4] sm:$0xf]
      %v287 = vld [vmem:[%s1 + $0x8] sm:$0xf]
      %v288 = vld [vmem:[%s1 + $0xc] sm:$0xf]
      %v289 = vld [vmem:[%s1 + $0x10] sm:$0xf]
      %v290 = vld [vmem:[%s1 + $0x14] sm:$0xf]
      %v291 = vld [vmem:[%s1 + $0x18] sm:$0xf]
      %v292 = vld [vmem:[%s1 + $0x1c] sm:$0xf]
      %v293 = vld [vmem:[%s1 + $0x20] sm:$0xf]
      %v294 = vld [vmem:[%s1 + $0x24] sm:$0xf]
      %v295 = vld [vmem:[%s1 + $0x28] sm:$0xf]
      %v296 = vld [vmem:[%s1 + $0x2c] sm:$0xf]
      %v297 = vld [vmem:[%s1 + $0x30] sm:$0xf]
      %v298 = vld [vmem:[%s1 + $0x34] sm:$0xf]
      %v299 = vld [vmem:[%s1 + $0x38] sm:$0xf]
      %v300 = vld [vmem:[%s1 + $0x3c] sm:$0xf]
      %v303 = vunpack.c.l.b16 %v283
      %v304 = vunpack.c.l.b16 %v284
      %v305 = vpack.c.b16 %v304, %v303
      %v323 = vunpack.c.l.b16 %v285
      %v324 = vunpack.c.l.b16 %v286
      %v325 = vunpack.c.l.b16 %v287
      %v326 = vunpack.c.l.b16 %v288
      %v327 = vunpack.c.l.b16 %v289
      %v328 = vunpack.c.l.b16 %v290
      %v329 = vunpack.c.l.b16 %v291
      %v330 = vunpack.c.l.b16 %v292
      %v331 = vunpack.c.l.b16 %v293
      %v332 = vunpack.c.l.b16 %v294
      %v333 = vunpack.c.l.b16 %v295
      %v334 = vunpack.c.l.b16 %v296
      %v335 = vunpack.c.l.b16 %v297
      %v336 = vunpack.c.l.b16 %v298
      %v337 = vunpack.c.l.b16 %v299
      %v338 = vunpack.c.l.b16 %v300
      %v339 = vpack.c.b16 %v324, %v323
      %v340 = vpack.c.b16 %v326, %v325
      %v341 = vpack.c.b16 %v328, %v327
      %v342 = vpack.c.b16 %v330, %v329
      %v343 = vpack.c.b16 %v332, %v331
      %v344 = vpack.c.b16 %v334, %v333
      %v345 = vpack.c.b16 %v336, %v335
      %v346 = vpack.c.b16 %v338, %v337
      %355 = vmatprep.subr.bf16.mxu0 0
      %356 = vmatpush1.bf16.msra.mxu0 %v339
      %357 = vmatprep.subr.bf16.mxu0 0
      %358 = vmatpush1.bf16.msra.mxu0 %v340
      %359 = vmatprep.subr.bf16.mxu0 0
      %360 = vmatpush1.bf16.msra.mxu0 %v341
      %361 = vmatprep.subr.bf16.mxu0 0
      %362 = vmatpush1.bf16.msra.mxu0 %v342
      %363 = vmatprep.subr.bf16.mxu0 0
      %364 = vmatpush1.bf16.msra.mxu0 %v343
      %365 = vmatprep.subr.bf16.mxu0 0
      %366 = vmatpush1.bf16.msra.mxu0 %v344
      %367 = vmatprep.subr.bf16.mxu0 0
      %368 = vmatpush1.bf16.msra.mxu0 %v345
      %369 = vmatprep.subr.bf16.mxu0 0
      %370 = vmatpush1.bf16.msra.mxu0 %v346
      %371 = vmatprep.subr.bf16.mxu0 0
      %372 = vmatpush1.bf16.msra.mxu0 0
      %373 = vmatprep.subr.bf16.mxu0 0
      %374 = vmatpush1.bf16.msra.mxu0 0
      %375 = vmatprep.subr.bf16.mxu0 0
      %376 = vmatpush1.bf16.msra.mxu0 0
      %377 = vmatprep.subr.bf16.mxu0 0
      %378 = vmatpush1.bf16.msra.mxu0 0
      %379 = vmatprep.subr.bf16.mxu0 0
      %380 = vmatpush1.bf16.msra.mxu0 0
      %381 = vmatprep.subr.bf16.mxu0 0
      %382 = vmatpush1.bf16.msra.mxu0 0
      %383 = vmatprep.subr.bf16.mxu0 0
      %384 = vmatpush1.bf16.msra.mxu0 0
      %385 = vmatprep.subr.bf16.mxu0 0
      %386 = vmatpush1.bf16.msra.mxu0 0
      %387 = vmatprep.mubr.bf16.mxu0 0
      %388 = vmatmul.mubr.bf16.gmra.mrb[0].mxu0 %v305
      %v389 = vpop.f32.mrb[0].mxu0
      %v390 = vadd.f32 0.0, %v389
      %v391 = vpop.f32.mrb[0].mxu0
      %v392 = vpop.f32.mrb[0].mxu0
      %v393 = vadd.f32 0.0, %v392
      %v394 = vpop.f32.mrb[0].mxu0
      %395 = vdwg.mxu0
      %v396 = vpack.c.bf16 %v393, %v390
      %v397 = vld [vmem:[%s2] sm:$0x1]
      %v399 = vpack.i.b16 %v397, %v397
      %v401 = vlaneseq
      %v402 = vshrl.u32 %v401, 7
      %v403 = vsub.s32 0, %v402
      %v404 = vrot.slane %v399, %v403
      %v405 = vadd.bf16 %v396, %v404
      %v406 = vmax.bf16 %v405, 0
      %v407 = vld [vmem:[%s3] sm:$0xf]
      %v408 = vld [vmem:[%s3 + $0x4] sm:$0xf]
      %v409 = vld [vmem:[%s3 + $0x8] sm:$0xf]
      %v410 = vld [vmem:[%s3 + $0xc] sm:$0xf]
      %v411 = vld [vmem:[%s3 + $0x10] sm:$0xf]
      %v412 = vld [vmem:[%s3 + $0x14] sm:$0xf]
      %v413 = vld [vmem:[%s3 + $0x18] sm:$0xf]
      %v414 = vld [vmem:[%s3 + $0x1c] sm:$0xf]
      %v415 = vld [vmem:[%s3 + $0x20] sm:$0xf]
      %v416 = vld [vmem:[%s3 + $0x24] sm:$0xf]
      %v417 = vld [vmem:[%s3 + $0x28] sm:$0xf]
      %v418 = vld [vmem:[%s3 + $0x2c] sm:$0xf]
      %v419 = vld [vmem:[%s3 + $0x30] sm:$0xf]
      %v420 = vld [vmem:[%s3 + $0x34] sm:$0xf]
      %v421 = vld [vmem:[%s3 + $0x38] sm:$0xf]
      %v422 = vld [vmem:[%s3 + $0x3c] sm:$0xf]
      %v439 = vunpack.c.l.b16 %v407
      %v440 = vunpack.c.l.b16 %v408
      %v441 = vunpack.c.l.b16 %v409
      %v442 = vunpack.c.l.b16 %v410
      %v443 = vunpack.c.l.b16 %v411
      %v444 = vunpack.c.l.b16 %v412
      %v445 = vunpack.c.l.b16 %v413
      %v446 = vunpack.c.l.b16 %v414
      %v447 = vunpack.c.l.b16 %v415
      %v448 = vunpack.c.l.b16 %v416
      %v449 = vunpack.c.l.b16 %v417
      %v450 = vunpack.c.l.b16 %v418
      %v451 = vunpack.c.l.b16 %v419
      %v452 = vunpack.c.l.b16 %v420
      %v453 = vunpack.c.l.b16 %v421
      %v454 = vunpack.c.l.b16 %v422
      %v455 = vpack.c.b16 %v440, %v439
      %v456 = vpack.c.b16 %v442, %v441
      %v457 = vpack.c.b16 %v444, %v443
      %v458 = vpack.c.b16 %v446, %v445
      %v459 = vpack.c.b16 %v448, %v447
      %v460 = vpack.c.b16 %v450, %v449
      %v461 = vpack.c.b16 %v452, %v451
      %v462 = vpack.c.b16 %v454, %v453
      %471 = vmatprep.subr.bf16.mxu0 0
      %472 = vmatpush1.bf16.msra.mxu0 %v455
      %473 = vmatprep.subr.bf16.mxu0 0
      %474 = vmatpush1.bf16.msra.mxu0 %v456
      %475 = vmatprep.subr.bf16.mxu0 0
      %476 = vmatpush1.bf16.msra.mxu0 %v457
      %477 = vmatprep.subr.bf16.mxu0 0
      %478 = vmatpush1.bf16.msra.mxu0 %v458
      %479 = vmatprep.subr.bf16.mxu0 0
      %480 = vmatpush1.bf16.msra.mxu0 %v459
      %481 = vmatprep.subr.bf16.mxu0 0
      %482 = vmatpush1.bf16.msra.mxu0 %v460
      %483 = vmatprep.subr.bf16.mxu0 0
      %484 = vmatpush1.bf16.msra.mxu0 %v461
      %485 = vmatprep.subr.bf16.mxu0 0
      %486 = vmatpush1.bf16.msra.mxu0 %v462
      %487 = vmatprep.subr.bf16.mxu0 0
      %488 = vmatpush1.bf16.msra.mxu0 0
      %489 = vmatprep.subr.bf16.mxu0 0
      %490 = vmatpush1.bf16.msra.mxu0 0
      %491 = vmatprep.subr.bf16.mxu0 0
      %492 = vmatpush1.bf16.msra.mxu0 0
      %493 = vmatprep.subr.bf16.mxu0 0
      %494 = vmatpush1.bf16.msra.mxu0 0
      %495 = vmatprep.subr.bf16.mxu0 0
      %496 = vmatpush1.bf16.msra.mxu0 0
      %497 = vmatprep.subr.bf16.mxu0 0
      %498 = vmatpush1.bf16.msra.mxu0 0
      %499 = vmatprep.subr.bf16.mxu0 0
      %500 = vmatpush1.bf16.msra.mxu0 0
      %501 = vmatprep.subr.bf16.mxu0 0
      %502 = vmatpush1.bf16.msra.mxu0 0
      %503 = vmatprep.mubr.bf16.mxu0 0
      %504 = vmatmul.mubr.bf16.gmra.mrb[0].mxu0 %v406
      %v505 = vpop.f32.mrb[0].mxu0
      %v506 = vadd.f32 0.0, %v505
      %v507 = vpop.f32.mrb[0].mxu0
      %v508 = vpop.f32.mrb[0].mxu0
      %v509 = vadd.f32 0.0, %v508
      %v510 = vpop.f32.mrb[0].mxu0
      %511 = vdwg.mxu0
      %v512 = vpack.c.bf16 %v509, %v506
      %v513 = vld [vmem:[%s4] sm:$0x1]
      %v515 = vpack.i.b16 %v513, %v513
      %v517 = vlaneseq
      %v518 = vshrl.u32 %v517, 7
      %v519 = vsub.s32 0, %v518
      %v520 = vrot.slane %v515, %v519
      %v521 = vadd.bf16 %v512, %v520
      %v522 = vmax.bf16 %v521, 0
      %v523 = vld [vmem:[%s5] sm:$0xf]
      %v524 = vld [vmem:[%s5 + $0x4] sm:$0xf]
      %v525 = vld [vmem:[%s5 + $0x8] sm:$0xf]
      %v526 = vld [vmem:[%s5 + $0xc] sm:$0xf]
      %v527 = vld [vmem:[%s5 + $0x10] sm:$0xf]
      %v528 = vld [vmem:[%s5 + $0x14] sm:$0xf]
      %v529 = vld [vmem:[%s5 + $0x18] sm:$0xf]
      %v530 = vld [vmem:[%s5 + $0x1c] sm:$0xf]
      %v531 = vld [vmem:[%s5 + $0x20] sm:$0xf]
      %v532 = vld [vmem:[%s5 + $0x24] sm:$0xf]
      %v533 = vld [vmem:[%s5 + $0x28] sm:$0xf]
      %v534 = vld [vmem:[%s5 + $0x2c] sm:$0xf]
      %v535 = vld [vmem:[%s5 + $0x30] sm:$0xf]
      %v536 = vld [vmem:[%s5 + $0x34] sm:$0xf]
      %v537 = vld [vmem:[%s5 + $0x38] sm:$0xf]
      %v538 = vld [vmem:[%s5 + $0x3c] sm:$0xf]
      %v539 = vld [vmem:[%s6] sm:$0x1]
      %v541 = vlaneseq
      %v542 = vshrl.u32 %v541, 7
      %v543 = vsub.s32 0, %v542
      %v544 = vrot.slane %v539, %v543
      %v562 = vunpack.c.l.b16 %v523
      %v563 = vunpack.c.l.b16 %v524
      %v564 = vunpack.c.l.b16 %v525
      %v565 = vunpack.c.l.b16 %v526
      %v566 = vunpack.c.l.b16 %v527
      %v567 = vunpack.c.l.b16 %v528
      %v568 = vunpack.c.l.b16 %v529
      %v569 = vunpack.c.l.b16 %v530
      %v570 = vunpack.c.l.b16 %v531
      %v571 = vunpack.c.l.b16 %v532
      %v572 = vunpack.c.l.b16 %v533
      %v573 = vunpack.c.l.b16 %v534
      %v574 = vunpack.c.l.b16 %v535
      %v575 = vunpack.c.l.b16 %v536
      %v576 = vunpack.c.l.b16 %v537
      %v577 = vunpack.c.l.b16 %v538
      %v578 = vpack.c.b16 %v563, %v562
      %v579 = vpack.c.b16 %v565, %v564
      %v580 = vpack.c.b16 %v567, %v566
      %v581 = vpack.c.b16 %v569, %v568
      %v582 = vpack.c.b16 %v571, %v570
      %v583 = vpack.c.b16 %v573, %v572
      %v584 = vpack.c.b16 %v575, %v574
      %v585 = vpack.c.b16 %v577, %v576
      %594 = vmatprep.subr.bf16.mxu0 0
      %595 = vmatpush1.bf16.msra.mxu0 %v578
      %596 = vmatprep.subr.bf16.mxu0 0
      %597 = vmatpush1.bf16.msra.mxu0 %v579
      %598 = vmatprep.subr.bf16.mxu0 0
      %599 = vmatpush1.bf16.msra.mxu0 %v580
      %600 = vmatprep.subr.bf16.mxu0 0
      %601 = vmatpush1.bf16.msra.mxu0 %v581
      %602 = vmatprep.subr.bf16.mxu0 0
      %603 = vmatpush1.bf16.msra.mxu0 %v582
      %604 = vmatprep.subr.bf16.mxu0 0
      %605 = vmatpush1.bf16.msra.mxu0 %v583
      %606 = vmatprep.subr.bf16.mxu0 0
      %607 = vmatpush1.bf16.msra.mxu0 %v584
      %608 = vmatprep.subr.bf16.mxu0 0
      %609 = vmatpush1.bf16.msra.mxu0 %v585
      %610 = vmatprep.subr.bf16.mxu0 0
      %611 = vmatpush1.bf16.msra.mxu0 0
      %612 = vmatprep.subr.bf16.mxu0 0
      %613 = vmatpush1.bf16.msra.mxu0 0
      %614 = vmatprep.subr.bf16.mxu0 0
      %615 = vmatpush1.bf16.msra.mxu0 0
      %616 = vmatprep.subr.bf16.mxu0 0
      %617 = vmatpush1.bf16.msra.mxu0 0
      %618 = vmatprep.subr.bf16.mxu0 0
      %619 = vmatpush1.bf16.msra.mxu0 0
      %620 = vmatprep.subr.bf16.mxu0 0
      %621 = vmatpush1.bf16.msra.mxu0 0
      %622 = vmatprep.subr.bf16.mxu0 0
      %623 = vmatpush1.bf16.msra.mxu0 0
      %624 = vmatprep.subr.bf16.mxu0 0
      %625 = vmatpush1.bf16.msra.mxu0 0
      %626 = vmatprep.mubr.bf16.mxu0 0
      %627 = vmatmul.mubr.bf16.gmra.mrb[0].mxu0 %v522
      %v628 = vpop.f32.mrb[0].mxu0
      %v629 = vadd.f32 %v544, %v628
      %v630 = vpop.f32.mrb[0].mxu0
      %v631 = vpop.f32.mrb[0].mxu0
      %v632 = vadd.f32 %v544, %v631
      %v633 = vpop.f32.mrb[0].mxu0
      %634 = vdwg.mxu0
      %635 = vmax.xlane.f32.xlu0 %v629
      %v636 = vpop.xlane.xlu0 %635
      %637 = vmax.xlane.f32.xlu0 %v632
      %v638 = vpop.xlane.xlu0 %637
      %v639 = vsub.f32 %v629, %v636
      %v640 = vsub.f32 %v632, %v638
      %v641 = vmul.f32 %v639, 1.442695
      %v642 = vpow.pop %v641
      %v643 = vmul.f32 %v640, 1.442695
      %v644 = vpow.pop %v643
      %645 = vadd.xlane.f32.xlu0 %v642
      %v646 = vpop.xlane.xlu0 %645
      %647 = vadd.xlane.f32.xlu0 %v644
      %v648 = vpop.xlane.xlu0 %647
      %v649 = vlog2.pop %v646
      %v650 = vmul.f32 %v649, 0.6931472
      %v651 = vlog2.pop %v648
      %v652 = vmul.f32 %v651, 0.6931472
      %v653 = vsub.f32 %v639, %v650
      %v654 = vsub.f32 %v640, %v652
      %v655 = vpack.c.bf16 %v654, %v653
      %v657 = vunpack.c.l.b16 %v655
      %v658 = vunpack.c.h.b16 %v655
      %v659 = vpack.c.b16 %v657, %v657
      %v660 = vpack.c.b16 %v658, %v658
      %663 = vst [vmem:[%s280] sm:$0xf] %v659
      %664 = vst [vmem:[%s280 + $0x4] sm:$0xf] %v660
      %s665 = smul.u32 2, %s18
      %p666 = scmp.lt.s32.totalorder %s665, 3
      %s667 = scalar_select %p666, %s665, 3
      %s668 = smul.addr %s667, 4
      %s669 = scalar_lea.vmem %s7, %s668
      // Predicated region
      $region49: #{_forward_impl.1} parent=47 // pred_check
        %p670 = pneg %p188
      $region50: #{_forward_impl.1} parent=47 // pred_check_branch
        %672 = sbr.rel (%p670) target = $region52
      $region51: #{_forward_impl.1} parent=47 // pred_region
        %s673 = smul.u32 2, %s18
      $region52: #{_forward_impl.1} parent=47 // pred_fallthru
        _
    $region48: #{_forward_impl.1} parent=5 // pred_fallthru
      _
    %p674 = scmp.le.s32.totalorder 2, %s13
    // Predicated region
    $region53: #{_forward_impl.1} parent=5 // pred_check
      %p675 = pneg %p674
    $region54: #{_forward_impl.1} parent=5 // pred_check_branch
      %677 = sbr.rel (%p675) target = $region56
    $region55: #{_forward_impl.1} parent=5 // pred_region
      %s678 = ssub.s32 %s13, 2
      // Predicated region
      $region57: #{_forward_impl.1} parent=55 // pred_check
        %p679 = pneg %p194
      $region58: #{_forward_impl.1} parent=55 // pred_check_branch
        %681 = sbr.rel (%p679) target = $region60
      $region59: #{_forward_impl.1} parent=55 // pred_region
        %s682 = smul.u32 2, %s19
        %p683 = scmp.lt.s32.totalorder %s682, 3
        %s684 = scalar_select %p683, %s682, 3
        %s685 = smul.addr %s684, 4
        %s686 = scalar_lea.vmem %s7, %s685
      $region60: #{_forward_impl.1} parent=55 // pred_fallthru
        _
    $region56: #{_forward_impl.1} parent=5 // pred_fallthru
      _
  $region6: #{_forward_impl.1} parent=0 // loop_footer
    %s17 = sadd.s32 1, %s13
  $region7: #{_forward_impl.1} parent=0 // loop_footer_branch
    %12 = sbr.rel target = $region3
  $region8: #{_forward_impl.1} parent=0 // loop_exit
    _

</llo_original>
